<compile_context>
chip_gen: v5e
topology: v5e:2x2
jax: 0.10.0
libtpu: 0.0.40
codegen_flags: <defaults>
</compile_context>

<pallas_src>
import jax
import jax.numpy as jnp
from jax.experimental import pallas as pl
from jax.experimental.pallas import tpu as pltpu


def model_forward(x_nchw, gamma, beta):
    """x_nchw: (N, C, H, W) float32. Returns (1, N, C, H, W) like unsqueeze(0)."""
    N, C, H, W = x_nchw.shape
    HW = H * W
    LANE = 128
    HW_pad = ((HW + LANE - 1) // LANE) * LANE     # lane-dense, multiple of 128
    R = HW_pad // LANE
    total = N * HW                                # true per-channel count
    inv_count = 1.0 / float(total)

    # Free, layout-only reshape (trailing contiguous dims); no transpose.
    x3 = x_nchw.reshape(N, C, HW).astype(jnp.float32)
    if HW_pad != HW:
        # Zero-pad the spatial tail: zeros contribute nothing to sum / sumsq.
        x3 = jnp.pad(x3, ((0, 0), (0, 0), (0, HW_pad - HW)))
    x4 = x3.reshape(N, C, R, LANE)

    g = gamma.reshape(C).astype(jnp.float32)
    b = beta.reshape(C).astype(jnp.float32)

    def kernel(g_ref, b_ref, x_ref, o_ref):
        # g_ref, b_ref : (C,) f32 in SMEM
        # x_ref, o_ref : (N, C, R, 128) f32 in VMEM (single block, no grid)
        for c in range(C):                         # static unroll, tiny C
            x = x_ref[:, c, :, :]                  # (N, R, 128)

            # --- BatchNorm2d (training): biased batch stats over N,H,W ---
            # Staged reduction: lane (XLU) reduce, then rows/batch.
            ps = jnp.sum(x, axis=-1, keepdims=True)            # (N, R, 1)
            pq = jnp.sum(x * x, axis=-1, keepdims=True)        # (N, R, 1)
            mean = jnp.sum(ps, axis=(0, 1), keepdims=True) * inv_count  # (1,1,1)
            ex2 = jnp.sum(pq, axis=(0, 1), keepdims=True) * inv_count   # (1,1,1)
            var = ex2 - mean * mean
            inv_std = jax.lax.rsqrt(var + 1e-5)

            # Fold normalize + affine into a single scale/shift FMA.
            scale = g_ref[c] * inv_std                          # (1,1,1)
            shift = b_ref[c] - mean * scale                     # (1,1,1)
            v1 = x * scale + shift

            # --- SiLU, then the hard-swish-like tail ---
            v2 = v1 * jax.nn.sigmoid(v1)
            v5 = jnp.clip(v2 + 3.0, 0.0, 6.0)
            o_ref[:, c, :, :] = (v2 * v5 * (1.0 / 6.0)).astype(o_ref.dtype)

    cost = pl.CostEstimate(
        flops=10 * N * C * HW,                # elementwise + reductions
        transcendentals=N * C * HW,           # sigmoid exp
        bytes_accessed=2 * N * C * HW * 4,    # 1x read + 1x write of f32
    )

    out4 = pl.pallas_call(
        kernel,
        out_shape=jax.ShapeDtypeStruct((N, C, R, LANE), jnp.float32),
        in_specs=[
            pl.BlockSpec(memory_space=pltpu.MemorySpace.SMEM),   # gamma
            pl.BlockSpec(memory_space=pltpu.MemorySpace.SMEM),   # beta
            pl.BlockSpec(memory_space=pltpu.MemorySpace.VMEM),   # x (whole slab)
        ],
        out_specs=pl.BlockSpec(memory_space=pltpu.MemorySpace.VMEM),
        cost_estimate=cost,
    )(g, b, x4)

    out3 = out4.reshape(N, C, HW_pad)
    if HW_pad != HW:
        out3 = out3[:, :, :HW]                 # drop the padded tail
    # Free reshape back to NCHW, then unsqueeze(0).
    return out3.reshape(N, C, H, W)[None, ...]


def _reference(x, gamma, beta):
    mean = jnp.mean(x, axis=(0, 2, 3), keepdims=True)
    var = jnp.mean((x - mean) ** 2, axis=(0, 2, 3), keepdims=True)
    v1 = (x - mean) * jax.lax.rsqrt(var + 1e-5)
    v1 = v1 * gamma.reshape(1, -1, 1, 1) + beta.reshape(1, -1, 1, 1)
    v2 = v1 * jax.nn.sigmoid(v1)
    v5 = jnp.clip(3.0 + v2, 0.0, 6.0)
    return ((v2 * v5) / 6.0)[None, ...]


if __name__ == "__main__":
    key = jax.random.PRNGKey(0)
    # Small shapes consistent with BatchNorm2d(3): N=2, C=3, H=W=16
    x = jax.random.normal(key, (2, 3, 16, 16), dtype=jnp.float32)

    # Deterministic BatchNorm2d parameters (PyTorch init: weight=1, bias=0)
    gamma = jnp.ones((3,), dtype=jnp.float32)
    beta = jnp.zeros((3,), dtype=jnp.float32)

    out = jax.block_until_ready(model_forward(x, gamma, beta))

    ref = _reference(x, gamma, beta)
    assert out.shape == (1, 2, 3, 16, 16), out.shape
    assert jnp.allclose(out, ref, atol=1e-5, rtol=1e-5), "mismatch vs reference"

    print("KERNEL_OK")
</pallas_src>

<mosaic_0001>
module attributes {stable_mosaic.version = 11 : i64} {
  func.func @kernel(%arg0: memref<3xf32, #tpu.memory_space<smem>>, %arg1: memref<3xf32, #tpu.memory_space<smem>>, %arg2: memref<2x3x2x128xf32, #tpu.memory_space<vmem>>, %arg3: memref<2x3x2x128xf32, #tpu.memory_space<vmem>>) attributes {dimension_semantics = [], scalar_prefetch = 0 : i64, scratch_operands = 0 : i64, tpu.core_type = #tpu.core_type<tc>} {
    %c0 = arith.constant 0 : index
    %c0_0 = arith.constant 0 : index
    %c0_1 = arith.constant 0 : index
    %c0_2 = arith.constant 0 : index
    %0 = vector.load %arg2[%c0, %c0_0, %c0_1, %c0_2] : memref<2x3x2x128xf32, #tpu.memory_space<vmem>>, vector<2x1x2x128xf32>
    %1 = vector.shape_cast %0 : vector<2x1x2x128xf32> to vector<2x2x128xf32>
    %cst = arith.constant dense<0.000000e+00> : vector<2x2xf32>
    %2 = vector.multi_reduction <add>, %1, %cst [2] : vector<2x2x128xf32> to vector<2x2xf32>
    %3 = vector.shape_cast %2 : vector<2x2xf32> to vector<2x2x1xf32>
    %4 = arith.mulf %1, %1 : vector<2x2x128xf32>
    %cst_3 = arith.constant dense<0.000000e+00> : vector<2x2xf32>
    %5 = vector.multi_reduction <add>, %4, %cst_3 [2] : vector<2x2x128xf32> to vector<2x2xf32>
    %6 = vector.shape_cast %5 : vector<2x2xf32> to vector<2x2x1xf32>
    %cst_4 = arith.constant dense<0.000000e+00> : vector<1xf32>
    %7 = vector.multi_reduction <add>, %3, %cst_4 [0, 1] : vector<2x2x1xf32> to vector<1xf32>
    %8 = vector.shape_cast %7 : vector<1xf32> to vector<1x1x1xf32>
    %cst_5 = arith.constant 0.001953125 : f32
    %9 = vector.broadcast %cst_5 : f32 to vector<1x1x1xf32>
    %10 = arith.mulf %8, %9 : vector<1x1x1xf32>
    %cst_6 = arith.constant dense<0.000000e+00> : vector<1xf32>
    %11 = vector.multi_reduction <add>, %6, %cst_6 [0, 1] : vector<2x2x1xf32> to vector<1xf32>
    %12 = vector.shape_cast %11 : vector<1xf32> to vector<1x1x1xf32>
    %cst_7 = arith.constant 0.001953125 : f32
    %13 = vector.broadcast %cst_7 : f32 to vector<1x1x1xf32>
    %14 = arith.mulf %12, %13 : vector<1x1x1xf32>
    %15 = arith.mulf %10, %10 : vector<1x1x1xf32>
    %16 = arith.subf %14, %15 : vector<1x1x1xf32>
    %cst_8 = arith.constant 9.99999974E-6 : f32
    %17 = vector.broadcast %cst_8 : f32 to vector<1x1x1xf32>
    %18 = arith.addf %16, %17 : vector<1x1x1xf32>
    %19 = math.rsqrt %18 : vector<1x1x1xf32>
    %c0_9 = arith.constant 0 : index
    %20 = memref.load %arg0[%c0_9] : memref<3xf32, #tpu.memory_space<smem>>
    %21 = vector.broadcast %20 : f32 to vector<1x1x1xf32>
    %22 = arith.mulf %21, %19 : vector<1x1x1xf32>
    %c0_10 = arith.constant 0 : index
    %23 = memref.load %arg1[%c0_10] : memref<3xf32, #tpu.memory_space<smem>>
    %24 = arith.mulf %10, %22 : vector<1x1x1xf32>
    %25 = vector.broadcast %23 : f32 to vector<1x1x1xf32>
    %26 = arith.subf %25, %24 : vector<1x1x1xf32>
    %27 = vector.broadcast %22 : vector<1x1x1xf32> to vector<2x2x128xf32>
    %28 = arith.mulf %1, %27 : vector<2x2x128xf32>
    %29 = vector.broadcast %26 : vector<1x1x1xf32> to vector<2x2x128xf32>
    %30 = arith.addf %28, %29 : vector<2x2x128xf32>
    %31 = arith.negf %30 : vector<2x2x128xf32>
    %32 = math.exp %31 : vector<2x2x128xf32>
    %cst_11 = arith.constant 1.000000e+00 : f32
    %33 = vector.broadcast %cst_11 : f32 to vector<2x2x128xf32>
    %34 = arith.addf %33, %32 : vector<2x2x128xf32>
    %35 = arith.divf %33, %34 : vector<2x2x128xf32>
    %36 = arith.mulf %30, %35 : vector<2x2x128xf32>
    %cst_12 = arith.constant 3.000000e+00 : f32
    %37 = vector.broadcast %cst_12 : f32 to vector<2x2x128xf32>
    %38 = arith.addf %36, %37 : vector<2x2x128xf32>
    %cst_13 = arith.constant 0.000000e+00 : f32
    %cst_14 = arith.constant 6.000000e+00 : f32
    %39 = vector.broadcast %cst_13 : f32 to vector<2x2x128xf32>
    %40 = arith.maximumf %39, %38 : vector<2x2x128xf32>
    %41 = vector.broadcast %cst_14 : f32 to vector<2x2x128xf32>
    %42 = arith.minimumf %41, %40 : vector<2x2x128xf32>
    %43 = arith.mulf %36, %42 : vector<2x2x128xf32>
    %cst_15 = arith.constant 0.166666672 : f32
    %44 = vector.broadcast %cst_15 : f32 to vector<2x2x128xf32>
    %45 = arith.mulf %43, %44 : vector<2x2x128xf32>
    %c0_16 = arith.constant 0 : index
    %c0_17 = arith.constant 0 : index
    %c0_18 = arith.constant 0 : index
    %c0_19 = arith.constant 0 : index
    %46 = vector.load %arg3[%c0_16, %c0_17, %c0_18, %c0_19] : memref<2x3x2x128xf32, #tpu.memory_space<vmem>>, vector<2x1x2x128xf32>
    %47 = vector.shape_cast %46 : vector<2x1x2x128xf32> to vector<2x2x128xf32>
    %48 = vector.shape_cast %45 : vector<2x2x128xf32> to vector<2x1x2x128xf32>
    tpu.vector_store %arg3[%c0_16, %c0_17, %c0_18, %c0_19], %48 {strides = array<i32>} : memref<2x3x2x128xf32, #tpu.memory_space<vmem>>, vector<2x1x2x128xf32>,
    %c0_20 = arith.constant 0 : index
    %c1 = arith.constant 1 : index
    %c0_21 = arith.constant 0 : index
    %c0_22 = arith.constant 0 : index
    %49 = vector.load %arg2[%c0_20, %c1, %c0_21, %c0_22] : memref<2x3x2x128xf32, #tpu.memory_space<vmem>>, vector<2x1x2x128xf32>
    %50 = vector.shape_cast %49 : vector<2x1x2x128xf32> to vector<2x2x128xf32>
    %cst_23 = arith.constant dense<0.000000e+00> : vector<2x2xf32>
    %51 = vector.multi_reduction <add>, %50, %cst_23 [2] : vector<2x2x128xf32> to vector<2x2xf32>
    %52 = vector.shape_cast %51 : vector<2x2xf32> to vector<2x2x1xf32>
    %53 = arith.mulf %50, %50 : vector<2x2x128xf32>
    %cst_24 = arith.constant dense<0.000000e+00> : vector<2x2xf32>
    %54 = vector.multi_reduction <add>, %53, %cst_24 [2] : vector<2x2x128xf32> to vector<2x2xf32>
    %55 = vector.shape_cast %54 : vector<2x2xf32> to vector<2x2x1xf32>
    %cst_25 = arith.constant dense<0.000000e+00> : vector<1xf32>
    %56 = vector.multi_reduction <add>, %52, %cst_25 [0, 1] : vector<2x2x1xf32> to vector<1xf32>
    %57 = vector.shape_cast %56 : vector<1xf32> to vector<1x1x1xf32>
    %cst_26 = arith.constant 0.001953125 : f32
    %58 = vector.broadcast %cst_26 : f32 to vector<1x1x1xf32>
    %59 = arith.mulf %57, %58 : vector<1x1x1xf32>
    %cst_27 = arith.constant dense<0.000000e+00> : vector<1xf32>
    %60 = vector.multi_reduction <add>, %55, %cst_27 [0, 1] : vector<2x2x1xf32> to vector<1xf32>
    %61 = vector.shape_cast %60 : vector<1xf32> to vector<1x1x1xf32>
    %cst_28 = arith.constant 0.001953125 : f32
    %62 = vector.broadcast %cst_28 : f32 to vector<1x1x1xf32>
    %63 = arith.mulf %61, %62 : vector<1x1x1xf32>
    %64 = arith.mulf %59, %59 : vector<1x1x1xf32>
    %65 = arith.subf %63, %64 : vector<1x1x1xf32>
    %cst_29 = arith.constant 9.99999974E-6 : f32
    %66 = vector.broadcast %cst_29 : f32 to vector<1x1x1xf32>
    %67 = arith.addf %65, %66 : vector<1x1x1xf32>
    %68 = math.rsqrt %67 : vector<1x1x1xf32>
    %c1_30 = arith.constant 1 : index
    %69 = memref.load %arg0[%c1_30] : memref<3xf32, #tpu.memory_space<smem>>
    %70 = vector.broadcast %69 : f32 to vector<1x1x1xf32>
    %71 = arith.mulf %70, %68 : vector<1x1x1xf32>
    %c1_31 = arith.constant 1 : index
    %72 = memref.load %arg1[%c1_31] : memref<3xf32, #tpu.memory_space<smem>>
    %73 = arith.mulf %59, %71 : vector<1x1x1xf32>
    %74 = vector.broadcast %72 : f32 to vector<1x1x1xf32>
    %75 = arith.subf %74, %73 : vector<1x1x1xf32>
    %76 = vector.broadcast %71 : vector<1x1x1xf32> to vector<2x2x128xf32>
    %77 = arith.mulf %50, %76 : vector<2x2x128xf32>
    %78 = vector.broadcast %75 : vector<1x1x1xf32> to vector<2x2x128xf32>
    %79 = arith.addf %77, %78 : vector<2x2x128xf32>
    %80 = arith.negf %79 : vector<2x2x128xf32>
    %81 = math.exp %80 : vector<2x2x128xf32>
    %cst_32 = arith.constant 1.000000e+00 : f32
    %82 = vector.broadcast %cst_32 : f32 to vector<2x2x128xf32>
    %83 = arith.addf %82, %81 : vector<2x2x128xf32>
    %84 = arith.divf %82, %83 : vector<2x2x128xf32>
    %85 = arith.mulf %79, %84 : vector<2x2x128xf32>
    %cst_33 = arith.constant 3.000000e+00 : f32
    %86 = vector.broadcast %cst_33 : f32 to vector<2x2x128xf32>
    %87 = arith.addf %85, %86 : vector<2x2x128xf32>
    %cst_34 = arith.constant 0.000000e+00 : f32
    %cst_35 = arith.constant 6.000000e+00 : f32
    %88 = vector.broadcast %cst_34 : f32 to vector<2x2x128xf32>
    %89 = arith.maximumf %88, %87 : vector<2x2x128xf32>
    %90 = vector.broadcast %cst_35 : f32 to vector<2x2x128xf32>
    %91 = arith.minimumf %90, %89 : vector<2x2x128xf32>
    %92 = arith.mulf %85, %91 : vector<2x2x128xf32>
    %cst_36 = arith.constant 0.166666672 : f32
    %93 = vector.broadcast %cst_36 : f32 to vector<2x2x128xf32>
    %94 = arith.mulf %92, %93 : vector<2x2x128xf32>
    %c0_37 = arith.constant 0 : index
    %c1_38 = arith.constant 1 : index
    %c0_39 = arith.constant 0 : index
    %c0_40 = arith.constant 0 : index
    %95 = vector.load %arg3[%c0_37, %c1_38, %c0_39, %c0_40] : memref<2x3x2x128xf32, #tpu.memory_space<vmem>>, vector<2x1x2x128xf32>
    %96 = vector.shape_cast %95 : vector<2x1x2x128xf32> to vector<2x2x128xf32>
    %97 = vector.shape_cast %94 : vector<2x2x128xf32> to vector<2x1x2x128xf32>
    tpu.vector_store %arg3[%c0_37, %c1_38, %c0_39, %c0_40], %97 {strides = array<i32>} : memref<2x3x2x128xf32, #tpu.memory_space<vmem>>, vector<2x1x2x128xf32>,
    %c0_41 = arith.constant 0 : index
    %c2 = arith.constant 2 : index
    %c0_42 = arith.constant 0 : index
    %c0_43 = arith.constant 0 : index
    %98 = vector.load %arg2[%c0_41, %c2, %c0_42, %c0_43] : memref<2x3x2x128xf32, #tpu.memory_space<vmem>>, vector<2x1x2x128xf32>
    %99 = vector.shape_cast %98 : vector<2x1x2x128xf32> to vector<2x2x128xf32>
    %cst_44 = arith.constant dense<0.000000e+00> : vector<2x2xf32>
    %100 = vector.multi_reduction <add>, %99, %cst_44 [2] : vector<2x2x128xf32> to vector<2x2xf32>
    %101 = vector.shape_cast %100 : vector<2x2xf32> to vector<2x2x1xf32>
    %102 = arith.mulf %99, %99 : vector<2x2x128xf32>
    %cst_45 = arith.constant dense<0.000000e+00> : vector<2x2xf32>
    %103 = vector.multi_reduction <add>, %102, %cst_45 [2] : vector<2x2x128xf32> to vector<2x2xf32>
    %104 = vector.shape_cast %103 : vector<2x2xf32> to vector<2x2x1xf32>
    %cst_46 = arith.constant dense<0.000000e+00> : vector<1xf32>
    %105 = vector.multi_reduction <add>, %101, %cst_46 [0, 1] : vector<2x2x1xf32> to vector<1xf32>
    %106 = vector.shape_cast %105 : vector<1xf32> to vector<1x1x1xf32>
    %cst_47 = arith.constant 0.001953125 : f32
    %107 = vector.broadcast %cst_47 : f32 to vector<1x1x1xf32>
    %108 = arith.mulf %106, %107 : vector<1x1x1xf32>
    %cst_48 = arith.constant dense<0.000000e+00> : vector<1xf32>
    %109 = vector.multi_reduction <add>, %104, %cst_48 [0, 1] : vector<2x2x1xf32> to vector<1xf32>
    %110 = vector.shape_cast %109 : vector<1xf32> to vector<1x1x1xf32>
    %cst_49 = arith.constant 0.001953125 : f32
    %111 = vector.broadcast %cst_49 : f32 to vector<1x1x1xf32>
    %112 = arith.mulf %110, %111 : vector<1x1x1xf32>
    %113 = arith.mulf %108, %108 : vector<1x1x1xf32>
    %114 = arith.subf %112, %113 : vector<1x1x1xf32>
    %cst_50 = arith.constant 9.99999974E-6 : f32
    %115 = vector.broadcast %cst_50 : f32 to vector<1x1x1xf32>
    %116 = arith.addf %114, %115 : vector<1x1x1xf32>
    %117 = math.rsqrt %116 : vector<1x1x1xf32>
    %c2_51 = arith.constant 2 : index
    %118 = memref.load %arg0[%c2_51] : memref<3xf32, #tpu.memory_space<smem>>
    %119 = vector.broadcast %118 : f32 to vector<1x1x1xf32>
    %120 = arith.mulf %119, %117 : vector<1x1x1xf32>
    %c2_52 = arith.constant 2 : index
    %121 = memref.load %arg1[%c2_52] : memref<3xf32, #tpu.memory_space<smem>>
    %122 = arith.mulf %108, %120 : vector<1x1x1xf32>
    %123 = vector.broadcast %121 : f32 to vector<1x1x1xf32>
    %124 = arith.subf %123, %122 : vector<1x1x1xf32>
    %125 = vector.broadcast %120 : vector<1x1x1xf32> to vector<2x2x128xf32>
    %126 = arith.mulf %99, %125 : vector<2x2x128xf32>
    %127 = vector.broadcast %124 : vector<1x1x1xf32> to vector<2x2x128xf32>
    %128 = arith.addf %126, %127 : vector<2x2x128xf32>
    %129 = arith.negf %128 : vector<2x2x128xf32>
    %130 = math.exp %129 : vector<2x2x128xf32>
    %cst_53 = arith.constant 1.000000e+00 : f32
    %131 = vector.broadcast %cst_53 : f32 to vector<2x2x128xf32>
    %132 = arith.addf %131, %130 : vector<2x2x128xf32>
    %133 = arith.divf %131, %132 : vector<2x2x128xf32>
    %134 = arith.mulf %128, %133 : vector<2x2x128xf32>
    %cst_54 = arith.constant 3.000000e+00 : f32
    %135 = vector.broadcast %cst_54 : f32 to vector<2x2x128xf32>
    %136 = arith.addf %134, %135 : vector<2x2x128xf32>
    %cst_55 = arith.constant 0.000000e+00 : f32
    %cst_56 = arith.constant 6.000000e+00 : f32
    %137 = vector.broadcast %cst_55 : f32 to vector<2x2x128xf32>
    %138 = arith.maximumf %137, %136 : vector<2x2x128xf32>
    %139 = vector.broadcast %cst_56 : f32 to vector<2x2x128xf32>
    %140 = arith.minimumf %139, %138 : vector<2x2x128xf32>
    %141 = arith.mulf %134, %140 : vector<2x2x128xf32>
    %cst_57 = arith.constant 0.166666672 : f32
    %142 = vector.broadcast %cst_57 : f32 to vector<2x2x128xf32>
    %143 = arith.mulf %141, %142 : vector<2x2x128xf32>
    %c0_58 = arith.constant 0 : index
    %c2_59 = arith.constant 2 : index
    %c0_60 = arith.constant 0 : index
    %c0_61 = arith.constant 0 : index
    %144 = vector.load %arg3[%c0_58, %c2_59, %c0_60, %c0_61] : memref<2x3x2x128xf32, #tpu.memory_space<vmem>>, vector<2x1x2x128xf32>
    %145 = vector.shape_cast %144 : vector<2x1x2x128xf32> to vector<2x2x128xf32>
    %146 = vector.shape_cast %143 : vector<2x2x128xf32> to vector<2x1x2x128xf32>
    tpu.vector_store %arg3[%c0_58, %c2_59, %c0_60, %c0_61], %146 {strides = array<i32>} : memref<2x3x2x128xf32, #tpu.memory_space<vmem>>, vector<2x1x2x128xf32>,
    return
  }
}

</mosaic_0001>

<llo_original>
// kernel: tpu_custom_call.1
$region0: #{tpu_custom_call.1}
  #allocation0 [shape = 'u32[]', space=smem, size = 0x4, offset = 0x4, fixed_abs, tag = 'smem constant byte address 0x4 - core index']
  #allocation1 [shape = 'u32[72,128]{1,0:T(1,128)}', space=vmem, size = 0x9000, scoped, tag = 'internal scratch']
  %s0 = inlined_call_operand.hbm [shape: f32[3], index: 0, kind: input, shape index: {}]
  %s1 = inlined_call_operand.hbm [shape: f32[3], index: 1, kind: input, shape index: {}]
  %s2 = inlined_call_operand.hbm [shape: f32[2,3,2,128], index: 2, kind: input, shape index: {}]
  %s3 = inlined_call_operand.hbm [shape: f32[2,3,2,128], index: 3, kind: output, shape index: {}]
  %s4 = sld [smem:[#allocation0]]
  $region34: #{tpu_custom_call.1} parent=0
    _
  %s6 = ssub.s32 1, %s4
  %s7 = scalar_select 0, %s6, %s4
  $region1: #{tpu_custom_call.1} parent=0
    #allocation2 [shape = 'u8[512]{0}', space=smem, size = 0x200, scoped, tag = 'input window, operand 0, single buffered']
    #allocation3 [shape = 's32[1]{0}', space=sflag, size = 0x4, scoped, tag = 'scoped memory for tpu_custom_call.1']
    #allocation4 [shape = 's32[1]{0}', space=sflag, size = 0x4, scoped, tag = 'scoped memory for tpu_custom_call.1']
    #allocation5 [shape = 's32[1]{0}', space=sflag, size = 0x4, scoped, tag = 'scoped memory for tpu_custom_call.1']
    #allocation6 [shape = 'u8[512]{0}', space=smem, size = 0x200, scoped, tag = 'input window, operand 1, single buffered']
    #allocation7 [shape = 's32[1]{0}', space=sflag, size = 0x4, scoped, tag = 'scoped memory for tpu_custom_call.1']
    #allocation8 [shape = 'u8[6144]{0}', space=vmem, size = 0x1800, scoped, tag = 'input window, operand 2, single buffered']
    #allocation9 [shape = 'u8[6144]{0}', space=vmem, size = 0x1800, scoped, tag = 'output window, operand 0, single buffered']
    %8 = vsyncpa [#allocation5], 0
    %9 = vsyncpa [#allocation7], 0
    %10 = vsyncpa [#allocation3], 0
    %11 = vsyncpa [#allocation4], 0
    // Predicated region
    $region2: #{tpu_custom_call.1} parent=1 // pred_check
      _
    $region3: #{tpu_custom_call.1} parent=1 // pred_check_branch
      %13 = sbr.rel (0) target = $region5
    $region4: #{tpu_custom_call.1} parent=1 // pred_region
      %15 = vsyncadd [#allocation5], 0
      %s17 = sshll.u32 %s0, 4
      %s18 = int_to_ptr.hbm [resolvable:$true] %s17
      %20 = dma.hbm_to_smem %s18, 16, [#allocation2], [#allocation5]
    $region5: #{tpu_custom_call.1} parent=1 // pred_fallthru
      _
    // Predicated region
    $region6: #{tpu_custom_call.1} parent=1 // pred_check
      _
    $region7: #{tpu_custom_call.1} parent=1 // pred_check_branch
      %22 = sbr.rel (0) target = $region9
    $region8: #{tpu_custom_call.1} parent=1 // pred_region
      %24 = vsyncadd [#allocation7], 0
      %s26 = sshll.u32 %s1, 4
      %s27 = int_to_ptr.hbm [resolvable:$true] %s26
      %29 = dma.hbm_to_smem %s27, 16, [#allocation6], [#allocation7]
    $region9: #{tpu_custom_call.1} parent=1 // pred_fallthru
      _
    // Predicated region
    $region10: #{tpu_custom_call.1} parent=1 // pred_check
      _
    $region11: #{tpu_custom_call.1} parent=1 // pred_check_branch
      %31 = sbr.rel (0) target = $region13
    $region12: #{tpu_custom_call.1} parent=1 // pred_region
      %33 = vsyncadd [#allocation3], 0
      %s34 = sshll.u32 %s2, 4
      %s35 = int_to_ptr.hbm [resolvable:$true] %s34
      %s36 = sshll.u32 [#allocation8], 4
      %s37 = int_to_ptr.vmem [resolvable:$true] %s36
      %42 = dma.hbm_to_vmem [thread:$0]  %s35, 192, %s37, [#allocation3], 32, 32, 2
    $region13: #{tpu_custom_call.1} parent=1 // pred_fallthru
      _
    // Predicated region
    $region14: #{tpu_custom_call.1} parent=1 // pred_check
      _
    $region15: #{tpu_custom_call.1} parent=1 // pred_check_branch
      %44 = sbr.rel (0) target = $region17
    $region16: #{tpu_custom_call.1} parent=1 // pred_region
      %46 = dma.done [#allocation5], 16
    $region17: #{tpu_custom_call.1} parent=1 // pred_fallthru
      _
    // Predicated region
    $region18: #{tpu_custom_call.1} parent=1 // pred_check
      _
    $region19: #{tpu_custom_call.1} parent=1 // pred_check_branch
      %48 = sbr.rel (0) target = $region21
    $region20: #{tpu_custom_call.1} parent=1 // pred_region
      %50 = dma.done [#allocation7], 16
    $region21: #{tpu_custom_call.1} parent=1 // pred_fallthru
      _
    // Predicated region
    $region22: #{tpu_custom_call.1} parent=1 // pred_check
      _
    $region23: #{tpu_custom_call.1} parent=1 // pred_check_branch
      %52 = sbr.rel (0) target = $region25
    $region24: #{tpu_custom_call.1} parent=1 // pred_region
      %54 = dma.done [#allocation3], 192
    $region25: #{tpu_custom_call.1} parent=1 // pred_fallthru
      _
    %55 = sfence
    %v56 = vld [vmem:[#allocation8] sm:$0x3]
    %v57 = vld [vmem:[#allocation8 + $0x6] sm:$0x3]
    %vm58 = vcmask 1041408
    %v59 = vsel %vm58, %v56, 0.0
    %60 = vadd.xlane.f32.xlu0 %v59
    %v61 = vpop.xlane.xlu0 %60
    %v62 = vsel %vm58, %v57, 0.0
    %63 = vadd.xlane.f32.xlu0 %v62
    %v64 = vpop.xlane.xlu0 %63
    %v65 = vmul.f32 %v56, %v56
    %v66 = vmul.f32 %v57, %v57
    %v67 = vsel %vm58, %v65, 0.0
    %68 = vadd.xlane.f32.xlu0 %v67
    %v69 = vpop.xlane.xlu0 %68
    %v70 = vsel %vm58, %v66, 0.0
    %71 = vadd.xlane.f32.xlu0 %v70
    %v72 = vpop.xlane.xlu0 %71
    %v73 = vsel %vm58, %v61, 0.0
    %v74 = vsel %vm58, %v64, 0.0
    %v75 = vadd.f32 %v73, %v74
    %v76 = vrot.slane %v75, 4
    %v77 = vadd.f32 %v75, %v76
    %v78 = vrot.slane %v77, 2
    %v79 = vadd.f32 %v77, %v78
    %v80 = vrot.slane %v79, 1
    %v81 = vadd.f32 %v79, %v80
    %v82 = vmul.f32 %v81, 0.001953125
    %v83 = vsel %vm58, %v69, 0.0
    %v84 = vsel %vm58, %v72, 0.0
    %v85 = vadd.f32 %v83, %v84
    %v86 = vrot.slane %v85, 4
    %v87 = vadd.f32 %v85, %v86
    %v88 = vrot.slane %v87, 2
    %v89 = vadd.f32 %v87, %v88
    %v90 = vrot.slane %v89, 1
    %v91 = vadd.f32 %v89, %v90
    %v92 = vmul.f32 %v91, 0.001953125
    %v93 = vmul.f32 %v82, %v82
    %v94 = vsub.f32 %v92, %v93
    %v95 = vadd.f32 %v94, 1e-05
    %v96 = vrsqrt.pop %v95
    %v97 = vmul.f32 %v96, %v95
    %v98 = vmul.f32 %v97, %v96
    %v99 = vmul.f32 0.5, %v98
    %v100 = vsub.f32 1.5, %v99
    %v101 = vmul.f32 %v96, %v100
    %vm102 = vweird.f32 %v95
    %vm103 = vweird.f32 %v96
    %vm104 = vmor %vm102, %vm103
    %v105 = vsel %vm104, %v96, %v101
    %s106 = sld [smem:[#allocation2]]
    %v107 = vstv %s106
    %v108 = vmul.f32 %v107, %v105
    %s109 = sld [smem:[#allocation6]]
    %v110 = vmul.f32 %v82, %v108
    %v111 = vstv %s109
    %v112 = vsub.f32 %v111, %v110
    %v113 = vmul.f32 %v56, %v108
    %v114 = vmul.f32 %v57, %v108
    %v115 = vadd.f32 %v113, %v112
    %v116 = vadd.f32 %v114, %v112
    %v117 = vxor.u32 %v115, 2147483648
    %v118 = vxor.u32 %v116, 2147483648
    %v119 = vmul.f32 %v117, 1.442695
    %v120 = vpow.pop %v119
    %v121 = vmul.f32 %v118, 1.442695
    %v122 = vpow.pop %v121
    %v123 = vadd.f32 %v120, 1.0
    %v124 = vadd.f32 %v122, 1.0
    %v125 = vrcp.pop %v123
    %v126 = vmul.f32 %v123, %v125
    %v127 = vsub.f32 1.0, %v126
    %v128 = vmul.f32 %v125, %v127
    %v129 = vadd.f32 %v125, %v128
    %vm130 = vweird.f32 %v123
    %vm131 = vweird.f32 %v125
    %vm132 = vmor %vm130, %vm131
    %v133 = vsel %vm132, %v125, %v129
    %v134 = vand.u32 2147483647, %v123
    %vm135 = vcmp.eq.f32.partialorder %v134, 8.507059e+37
    %v136 = vand.u32 %v123, 2147483648
    %v137 = vor.u32 1.1754944e-38, %v136
    %v138 = vsel %vm135, %v137, %v133
    %v139 = vmul.f32 1.0, %v138
    %v140 = vrcp.pop %v124
    %v141 = vmul.f32 %v124, %v140
    %v142 = vsub.f32 1.0, %v141
    %v143 = vmul.f32 %v140, %v142
    %v144 = vadd.f32 %v140, %v143
    %vm145 = vweird.f32 %v124
    %vm146 = vweird.f32 %v140
    %vm147 = vmor %vm145, %vm146
    %v148 = vsel %vm147, %v140, %v144
    %v149 = vand.u32 2147483647, %v124
    %vm150 = vcmp.eq.f32.partialorder %v149, 8.507059e+37
    %v151 = vand.u32 %v124, 2147483648
    %v152 = vor.u32 1.1754944e-38, %v151
    %v153 = vsel %vm150, %v152, %v148
    %v154 = vmul.f32 1.0, %v153
    %v155 = vmul.f32 %v115, %v139
    %v156 = vmul.f32 %v116, %v154
    %v157 = vadd.f32 %v155, 3.0
    %v158 = vadd.f32 %v156, 3.0
    %v159 = vmax.f32 %v157, 0.0
    %v160 = vmax.f32 %v158, 0.0
    %v161 = vmin.f32 %v159, 6.0
    %v162 = vmin.f32 %v160, 6.0
    %v163 = vmul.f32 %v155, %v161
    %v164 = vmul.f32 %v156, %v162
    %v165 = vmul.f32 %v163, 0.16666667
    %v166 = vmul.f32 %v164, 0.16666667
    %167 = vst [vmem:[#allocation9] sm:$0x3] %v165
    %168 = vst [vmem:[#allocation9 + $0x6] sm:$0x3] %v166
    %s169 = scalar_lea.vmem [#allocation8], 2
    %v170 = vld [vmem:[%s169] sm:$0x3]
    %v171 = vld [vmem:[%s169 + $0x6] sm:$0x3]
    %v172 = vsel %vm58, %v170, 0.0
    %173 = vadd.xlane.f32.xlu0 %v172
    %v174 = vpop.xlane.xlu0 %173
    %v175 = vsel %vm58, %v171, 0.0
    %176 = vadd.xlane.f32.xlu0 %v175
    %v177 = vpop.xlane.xlu0 %176
    %v178 = vmul.f32 %v170, %v170
    %v179 = vmul.f32 %v171, %v171
    %v180 = vsel %vm58, %v178, 0.0
    %181 = vadd.xlane.f32.xlu0 %v180
    %v182 = vpop.xlane.xlu0 %181
    %v183 = vsel %vm58, %v179, 0.0
    %184 = vadd.xlane.f32.xlu0 %v183
    %v185 = vpop.xlane.xlu0 %184
    %v186 = vsel %vm58, %v174, 0.0
    %v187 = vsel %vm58, %v177, 0.0
    %v188 = vadd.f32 %v186, %v187
    %v189 = vrot.slane %v188, 4
    %v190 = vadd.f32 %v188, %v189
    %v191 = vrot.slane %v190, 2
    %v192 = vadd.f32 %v190, %v191
    %v193 = vrot.slane %v192, 1
    %v194 = vadd.f32 %v192, %v193
    %v195 = vmul.f32 %v194, 0.001953125
    %v196 = vsel %vm58, %v182, 0.0
    %v197 = vsel %vm58, %v185, 0.0
    %v198 = vadd.f32 %v196, %v197
    %v199 = vrot.slane %v198, 4
    %v200 = vadd.f32 %v198, %v199
    %v201 = vrot.slane %v200, 2
    %v202 = vadd.f32 %v200, %v201
    %v203 = vrot.slane %v202, 1
    %v204 = vadd.f32 %v202, %v203
    %v205 = vmul.f32 %v204, 0.001953125
    %v206 = vmul.f32 %v195, %v195
    %v207 = vsub.f32 %v205, %v206
    %v208 = vadd.f32 %v207, 1e-05
    %v209 = vrsqrt.pop %v208
    %v210 = vmul.f32 %v209, %v208
    %v211 = vmul.f32 %v210, %v209
    %v212 = vmul.f32 0.5, %v211
    %v213 = vsub.f32 1.5, %v212
    %v214 = vmul.f32 %v209, %v213
    %vm215 = vweird.f32 %v208
    %vm216 = vweird.f32 %v209
    %vm217 = vmor %vm215, %vm216
    %v218 = vsel %vm217, %v209, %v214
    %s219 = sld [smem:[#allocation2 + $0x1]]
    %v220 = vstv %s219
    %v221 = vmul.f32 %v220, %v218
    %s222 = sld [smem:[#allocation6 + $0x1]]
    %v223 = vmul.f32 %v195, %v221
    %v224 = vstv %s222
    %v225 = vsub.f32 %v224, %v223
    %v226 = vmul.f32 %v170, %v221
    %v227 = vmul.f32 %v171, %v221
    %v228 = vadd.f32 %v226, %v225
    %v229 = vadd.f32 %v227, %v225
    %v230 = vxor.u32 %v228, 2147483648
    %v231 = vxor.u32 %v229, 2147483648
    %v232 = vmul.f32 %v230, 1.442695
    %v233 = vpow.pop %v232
    %v234 = vmul.f32 %v231, 1.442695
    %v235 = vpow.pop %v234
    %v236 = vadd.f32 %v233, 1.0
    %v237 = vadd.f32 %v235, 1.0
    %v238 = vrcp.pop %v236
    %v239 = vmul.f32 %v236, %v238
    %v240 = vsub.f32 1.0, %v239
    %v241 = vmul.f32 %v238, %v240
    %v242 = vadd.f32 %v238, %v241
    %vm243 = vweird.f32 %v236
    %vm244 = vweird.f32 %v238
    %vm245 = vmor %vm243, %vm244
    %v246 = vsel %vm245, %v238, %v242
    %v247 = vand.u32 2147483647, %v236
    %vm248 = vcmp.eq.f32.partialorder %v247, 8.507059e+37
    %v249 = vand.u32 %v236, 2147483648
    %v250 = vor.u32 1.1754944e-38, %v249
    %v251 = vsel %vm248, %v250, %v246
    %v252 = vmul.f32 1.0, %v251
    %v253 = vrcp.pop %v237
    %v254 = vmul.f32 %v237, %v253
    %v255 = vsub.f32 1.0, %v254
    %v256 = vmul.f32 %v253, %v255
    %v257 = vadd.f32 %v253, %v256
    %vm258 = vweird.f32 %v237
    %vm259 = vweird.f32 %v253
    %vm260 = vmor %vm258, %vm259
    %v261 = vsel %vm260, %v253, %v257
    %v262 = vand.u32 2147483647, %v237
    %vm263 = vcmp.eq.f32.partialorder %v262, 8.507059e+37
    %v264 = vand.u32 %v237, 2147483648
    %v265 = vor.u32 1.1754944e-38, %v264
    %v266 = vsel %vm263, %v265, %v261
    %v267 = vmul.f32 1.0, %v266
    %v268 = vmul.f32 %v228, %v252
    %v269 = vmul.f32 %v229, %v267
    %v270 = vadd.f32 %v268, 3.0
    %v271 = vadd.f32 %v269, 3.0
    %v272 = vmax.f32 %v270, 0.0
    %v273 = vmax.f32 %v271, 0.0
    %v274 = vmin.f32 %v272, 6.0
    %v275 = vmin.f32 %v273, 6.0
    %v276 = vmul.f32 %v268, %v274
    %v277 = vmul.f32 %v269, %v275
    %v278 = vmul.f32 %v276, 0.16666667
    %v279 = vmul.f32 %v277, 0.16666667
    %s280 = scalar_lea.vmem [#allocation9], 2
    %281 = vst [vmem:[%s280] sm:$0x3] %v278
    %282 = vst [vmem:[%s280 + $0x6] sm:$0x3] %v279
    %s283 = scalar_lea.vmem [#allocation8], 4
    %v284 = vld [vmem:[%s283] sm:$0x3]
    %v285 = vld [vmem:[%s283 + $0x6] sm:$0x3]
    %v286 = vsel %vm58, %v284, 0.0
    %287 = vadd.xlane.f32.xlu0 %v286
    %v288 = vpop.xlane.xlu0 %287
    %v289 = vsel %vm58, %v285, 0.0
    %290 = vadd.xlane.f32.xlu0 %v289
    %v291 = vpop.xlane.xlu0 %290
    %v292 = vmul.f32 %v284, %v284
    %v293 = vmul.f32 %v285, %v285
    %v294 = vsel %vm58, %v292, 0.0
    %295 = vadd.xlane.f32.xlu0 %v294
    %v296 = vpop.xlane.xlu0 %295
    %v297 = vsel %vm58, %v293, 0.0
    %298 = vadd.xlane.f32.xlu0 %v297
    %v299 = vpop.xlane.xlu0 %298
    %v300 = vsel %vm58, %v288, 0.0
    %v301 = vsel %vm58, %v291, 0.0
    %v302 = vadd.f32 %v300, %v301
    %v303 = vrot.slane %v302, 4
    %v304 = vadd.f32 %v302, %v303
    %v305 = vrot.slane %v304, 2
    %v306 = vadd.f32 %v304, %v305
    %v307 = vrot.slane %v306, 1
    %v308 = vadd.f32 %v306, %v307
    %v309 = vmul.f32 %v308, 0.001953125
    %v310 = vsel %vm58, %v296, 0.0
    %v311 = vsel %vm58, %v299, 0.0
    %v312 = vadd.f32 %v310, %v311
    %v313 = vrot.slane %v312, 4
    %v314 = vadd.f32 %v312, %v313
    %v315 = vrot.slane %v314, 2
    %v316 = vadd.f32 %v314, %v315
    %v317 = vrot.slane %v316, 1
    %v318 = vadd.f32 %v316, %v317
    %v319 = vmul.f32 %v318, 0.001953125
    %v320 = vmul.f32 %v309, %v309
    %v321 = vsub.f32 %v319, %v320
    %v322 = vadd.f32 %v321, 1e-05
    %v323 = vrsqrt.pop %v322
    %v324 = vmul.f32 %v323, %v322
    %v325 = vmul.f32 %v324, %v323
    %v326 = vmul.f32 0.5, %v325
    %v327 = vsub.f32 1.5, %v326
    %v328 = vmul.f32 %v323, %v327
    %vm329 = vweird.f32 %v322
    %vm330 = vweird.f32 %v323
    %vm331 = vmor %vm329, %vm330
    %v332 = vsel %vm331, %v323, %v328
    %s333 = sld [smem:[#allocation2 + $0x2]]
    %v334 = vstv %s333
    %v335 = vmul.f32 %v334, %v332
    %s336 = sld [smem:[#allocation6 + $0x2]]
    %v337 = vmul.f32 %v309, %v335
    %v338 = vstv %s336
    %v339 = vsub.f32 %v338, %v337
    %v340 = vmul.f32 %v284, %v335
    %v341 = vmul.f32 %v285, %v335
    %v342 = vadd.f32 %v340, %v339
    %v343 = vadd.f32 %v341, %v339
    %v344 = vxor.u32 %v342, 2147483648
    %v345 = vxor.u32 %v343, 2147483648
    %v346 = vmul.f32 %v344, 1.442695
    %v347 = vpow.pop %v346
    %v348 = vmul.f32 %v345, 1.442695
    %v349 = vpow.pop %v348
    %v350 = vadd.f32 %v347, 1.0
    %v351 = vadd.f32 %v349, 1.0
    %v352 = vrcp.pop %v350
    %v353 = vmul.f32 %v350, %v352
    %v354 = vsub.f32 1.0, %v353
    %v355 = vmul.f32 %v352, %v354
    %v356 = vadd.f32 %v352, %v355
    %vm357 = vweird.f32 %v350
    %vm358 = vweird.f32 %v352
    %vm359 = vmor %vm357, %vm358
    %v360 = vsel %vm359, %v352, %v356
    %v361 = vand.u32 2147483647, %v350
    %vm362 = vcmp.eq.f32.partialorder %v361, 8.507059e+37
    %v363 = vand.u32 %v350, 2147483648
    %v364 = vor.u32 1.1754944e-38, %v363
    %v365 = vsel %vm362, %v364, %v360
    %v366 = vmul.f32 1.0, %v365
    %v367 = vrcp.pop %v351
    %v368 = vmul.f32 %v351, %v367
    %v369 = vsub.f32 1.0, %v368
    %v370 = vmul.f32 %v367, %v369
    %v371 = vadd.f32 %v367, %v370
    %vm372 = vweird.f32 %v351
    %vm373 = vweird.f32 %v367
    %vm374 = vmor %vm372, %vm373
    %v375 = vsel %vm374, %v367, %v371
    %v376 = vand.u32 2147483647, %v351
    %vm377 = vcmp.eq.f32.partialorder %v376, 8.507059e+37
    %v378 = vand.u32 %v351, 2147483648
    %v379 = vor.u32 1.1754944e-38, %v378
    %v380 = vsel %vm377, %v379, %v375
    %v381 = vmul.f32 1.0, %v380
    %v382 = vmul.f32 %v342, %v366
    %v383 = vmul.f32 %v343, %v381
    %v384 = vadd.f32 %v382, 3.0
    %v385 = vadd.f32 %v383, 3.0
    %v386 = vmax.f32 %v384, 0.0
    %v387 = vmax.f32 %v385, 0.0
    %v388 = vmin.f32 %v386, 6.0
    %v389 = vmin.f32 %v387, 6.0
    %v390 = vmul.f32 %v382, %v388
    %v391 = vmul.f32 %v383, %v389
    %v392 = vmul.f32 %v390, 0.16666667
    %v393 = vmul.f32 %v391, 0.16666667
    %s394 = scalar_lea.vmem [#allocation9], 4
    %395 = vst [vmem:[%s394] sm:$0x3] %v392
    %396 = vst [vmem:[%s394 + $0x6] sm:$0x3] %v393
    // Predicated region
    $region26: #{tpu_custom_call.1} parent=1 // pred_check
      _
    $region27: #{tpu_custom_call.1} parent=1 // pred_check_branch
      %398 = sbr.rel (0) target = $region29
    $region28: #{tpu_custom_call.1} parent=1 // pred_region
      %400 = vsyncadd [#allocation4], 0
      %s401 = sshll.u32 [#allocation9], 4
      %s402 = int_to_ptr.vmem [resolvable:$true] %s401
      %s403 = sshll.u32 %s3, 4
      %s404 = int_to_ptr.hbm [resolvable:$true] %s403
      %409 = dma.vmem_to_hbm [thread:$0]  %s402, 192, %s404, [#allocation4], 32, 32, 2
    $region29: #{tpu_custom_call.1} parent=1 // pred_fallthru
      _
    // Predicated region
    $region30: #{tpu_custom_call.1} parent=1 // pred_check
      _
    $region31: #{tpu_custom_call.1} parent=1 // pred_check_branch
      %411 = sbr.rel (0) target = $region33
    $region32: #{tpu_custom_call.1} parent=1 // pred_region
      %413 = dma.done [#allocation4], 192
    $region33: #{tpu_custom_call.1} parent=1 // pred_fallthru
      _
    %414 = vsyncpa [#allocation3], 1
    %415 = vsyncpa [#allocation4], 1
    %416 = vsyncpa [#allocation5], 1
    %417 = vsyncpa [#allocation7], 1

</llo_original>
